<compile_context>
chip_gen: v5e
topology: v5e:2x2
jax: 0.10.0
libtpu: 0.0.40
codegen_flags: <defaults>
</compile_context>

<pallas_src>
import math

import jax
import jax.numpy as jnp
from jax import lax
from jax.experimental import pallas as pl
from jax.experimental.pallas import tpu as pltpu


# --------------------------- small helpers ---------------------------
def _round_up(v, m):
    return ((v + m - 1) // m) * m


def _vmem_limit_bytes():
    """Generation-aware scoped-VMEM limit (leave headroom below physical)."""
    cap = 128 << 20
    try:
        cap = int(getattr(pltpu.get_tpu_info(), "vmem_capacity_bytes", cap))
    except Exception:
        pass
    return int(min(max(cap - (16 << 20), 16 << 20), 96 << 20))


def _per_lane_bytes(C, T, itemsize):
    # x (2 bufs) + out (2 bufs) + f32 attn temps + unpacked tap masks + slack.
    return 4 * C * itemsize + 8 * T + 9 * itemsize + 24


def _choose_tile(HW, per_lane, budget, cap=2048):
    """Largest lane-dense (multiple-of-128) tile fitting the per-step byte budget."""
    t = (budget // max(per_lane, 1)) // 128 * 128
    t = max(128, min(cap, t))
    return min(t, _round_up(HW, 128))


def _border_masks(H, W):
    """mask9[kh*3+kw, h*W+w] = 1 where 3x3-conv tap (kh, kw) (SAME, zero padding)
    picks up pixel (h, w) when summed over all output positions."""
    assert H >= 2 and W >= 2, "folded 3x3 conv needs H >= 2 and W >= 2"
    rows, cols = [], []
    for k in range(3):
        r = jnp.ones((H,), jnp.float32)
        c = jnp.ones((W,), jnp.float32)
        if k == 0:
            r = r.at[H - 1].set(0.0)
            c = c.at[W - 1].set(0.0)
        elif k == 2:
            r = r.at[0].set(0.0)
            c = c.at[0].set(0.0)
        rows.append(r)
        cols.append(c)
    m = [(rows[kh][:, None] * cols[kw][None, :]).reshape(H * W)
         for kh in range(3) for kw in range(3)]
    return jnp.stack(m, axis=0)                                       # (9, HW)


def _packed_tap_bits(H, W, HWp):
    """One int32 per pixel; bit k == border mask of 3x3 tap k (0 in the pad region)."""
    m9 = _border_masks(H, W).astype(jnp.int32)                        # (9, HW) of 0/1
    bits = jnp.zeros((H * W,), jnp.int32)
    for k in range(9):
        bits = bits | (m9[k] << k)
    out = jnp.zeros((1, HWp), jnp.int32)
    return out.at[0, :H * W].set(bits)


# --------------------------- kernel building blocks ---------------------------
def _write_dice(g, d_ref, T):
    """dice_coeff from the token Gram matrix g[i,j] = <attn_i, attn_j>."""
    ri = lax.broadcasted_iota(jnp.int32, (T, T), 0)
    ci = lax.broadcasted_iota(jnp.int32, (T, T), 1)
    eye = (ri == ci).astype(jnp.float32)
    diag_col = jnp.sum(g * eye, axis=1, keepdims=True)                # (T, 1) = G[i,i]
    diag_row = jnp.sum(g * eye, axis=0, keepdims=True)                # (1, T) = G[j,j]
    d = (2.0 * g) / (diag_col + diag_row + 2e-12)
    dice = jnp.sum(d * (1.0 - eye)) * (1.0 / (T * (T - 1)))
    d_ref[...] = jnp.full(d_ref.shape, dice, dtype=d_ref.dtype)


def _token_weights(weff_ref, beff_ref, s, inv_hw):
    """softmax_T of the folded 3x3conv + GAP + 1x1conv logits, from S (9, C)."""
    acc = weff_ref[0] * s[0:1, :]                                     # (T, C) f32, VPU only
    for k in range(1, 9):
        acc = acc + weff_ref[k] * s[k:k + 1, :]
    logits = beff_ref[...] + inv_hw * jnp.sum(acc, axis=1, keepdims=True)   # (T, 1)
    return jax.nn.softmax(logits, axis=0)


def _unpack_m9(tap, bits, dtype):
    """(1, tile) packed bits + (9, 1) bit values -> (9, tile) 0/1 masks in `dtype`."""
    return ((tap & bits) > 0).astype(dtype)


def _make_fused_sum_kernel(T, HW, tile, padded):
    """weight_mask=False, single read of x: out = x * sum_t sigmoid(mt @ x); dice."""
    def kernel(mt_ref, x_ref, o_ref, d_ref, g_scr):
        h = pl.program_id(1)

        @pl.when(h == 0)
        def _():
            g_scr[...] = jnp.zeros_like(g_scr)

        x = x_ref[0]                                                  # (C, tile), native dtype
        attn = jax.nn.sigmoid(
            jnp.dot(mt_ref[...], x, preferred_element_type=jnp.float32))     # (T, tile) f32
        if padded:
            idx = h * tile + lax.broadcasted_iota(jnp.int32, (1, tile), 1)
            attn_g = attn * (idx < HW).astype(jnp.float32)
        else:
            attn_g = attn
        g_scr[...] += lax.dot_general(attn_g, attn_g, (((1,), (1,)), ((), ())),
                                      preferred_element_type=jnp.float32)    # (T, T)

        combined = jnp.sum(attn, axis=0, keepdims=True)               # (1, tile) f32
        o_ref[0] = (x * combined.astype(x.dtype)).astype(o_ref.dtype)

        @pl.when(h == pl.num_programs(1) - 1)
        def _():
            _write_dice(g_scr[...], d_ref, T)

    return kernel


def _make_single_pass_kernel(T, HW, HWp, inv_hw):
    """weight_mask=True, whole padded sample in VMEM: one read of x per sample."""
    padded = HWp != HW

    def kernel(mt_ref, weff_ref, beff_ref, bits_ref, tap_ref, x_ref, o_ref, d_ref):
        x = x_ref[0]                                                  # (C, HWp), native dtype
        attn = jax.nn.sigmoid(
            jnp.dot(mt_ref[...], x, preferred_element_type=jnp.float32))     # (T, HWp) f32
        if padded:
            idx = lax.broadcasted_iota(jnp.int32, (1, HWp), 1)
            attn_g = attn * (idx < HW).astype(jnp.float32)
        else:
            attn_g = attn
        g = lax.dot_general(attn_g, attn_g, (((1,), (1,)), ((), ())),
                            preferred_element_type=jnp.float32)       # (T, T)
        _write_dice(g, d_ref, T)

        # folded 3x3conv + GAP + 1x1conv -> per-token softmax weights
        m9 = _unpack_m9(tap_ref[...], bits_ref[...], x.dtype)         # (9, HWp)
        s = lax.dot_general(m9, x, (((1,), (1,)), ((), ())),
                            preferred_element_type=jnp.float32)       # (9, C)
        wts = _token_weights(weff_ref, beff_ref, s, inv_hw)           # (T, 1)

        combined = jnp.sum(attn * wts, axis=0, keepdims=True)         # (1, HWp) f32
        o_ref[0] = (x * combined.astype(x.dtype)).astype(o_ref.dtype)

    return kernel


def _make_reduce_kernel(T, HW, tile, inv_hw, padded):
    """weight_mask=True fallback pass 1: per-sample Gram + border sums -> weights, dice."""
    def kernel(mt_ref, weff_ref, beff_ref, bits_ref, tap_ref, x_ref, w_ref, d_ref,
               g_scr, s_scr):
        h = pl.program_id(1)

        @pl.when(h == 0)
        def _():
            g_scr[...] = jnp.zeros_like(g_scr)
            s_scr[...] = jnp.zeros_like(s_scr)

        x = x_ref[0]                                                  # (C, tile), native dtype
        attn = jax.nn.sigmoid(
            jnp.dot(mt_ref[...], x, preferred_element_type=jnp.float32))
        if padded:
            idx = h * tile + lax.broadcasted_iota(jnp.int32, (1, tile), 1)
            attn = attn * (idx < HW).astype(jnp.float32)
        g_scr[...] += lax.dot_general(attn, attn, (((1,), (1,)), ((), ())),
                                      preferred_element_type=jnp.float32)
        m9 = _unpack_m9(tap_ref[...], bits_ref[...], x.dtype)         # (9, tile)
        s_scr[...] += lax.dot_general(m9, x, (((1,), (1,)), ((), ())),
                                      preferred_element_type=jnp.float32)

        @pl.when(h == pl.num_programs(1) - 1)
        def _():
            _write_dice(g_scr[...], d_ref, T)
            wts = _token_weights(weff_ref, beff_ref, s_scr[...], inv_hw)
            w_ref[0] = jnp.broadcast_to(wts, (T, 128)).astype(w_ref.dtype)

    return kernel


def _apply_kernel(mt_ref, w_ref, x_ref, o_ref):
    """weight_mask=True fallback pass 2: out = x * (weights . sigmoid(mt @ x))."""
    x = x_ref[0]                                                      # (C, tile)
    attn = jax.nn.sigmoid(
        jnp.dot(mt_ref[...], x, preferred_element_type=jnp.float32))  # (T, tile) f32
    w = w_ref[0][:, 0:1]                                              # (T, 1)
    combined = jnp.sum(attn * w, axis=0, keepdims=True)               # (1, tile)
    o_ref[0] = (x * combined.astype(x.dtype)).astype(o_ref.dtype)


# --------------------------- host-side wrapper ---------------------------
def mask_module_forward_pallas(x, params, *, weight_mask=True, tile_hw=None,
                               force_two_pass=False):
    """MaskModule.forward / forward_train:  returns (out, mask_loss)."""
    N, C, H, W = x.shape
    T = params["mask_token"].shape[0]
    HW = H * W
    assert T >= 2, "dice_coeff needs at least 2 tokens"
    assert H >= 2 and W >= 2, "MaskModule prob branch needs H >= 2 and W >= 2"

    isz = jnp.dtype(x.dtype).itemsize
    limit = _vmem_limit_bytes()
    budget = limit // 2
    per_lane = _per_lane_bytes(C, T, isz)

    mt = params["mask_token"].astype(x.dtype)        # feed the MXU in x's dtype

    def rep(shape, rank):
        zeros = (0,) * len(shape)
        if rank == 1:
            return pl.BlockSpec(shape, lambda n, _z=zeros: _z)
        return pl.BlockSpec(shape, lambda n, h, _z=zeros: _z)

    def cparams(sem):
        return pltpu.CompilerParams(dimension_semantics=sem, vmem_limit_bytes=limit)

    if weight_mask:
        # Fold 1x1conv o GAP o 3x3conv:  logits = (1/HW) sum_k Weff[k] . S[k] + beff
        w1 = params["conv1_w"][:, :, 0, 0].astype(jnp.float32)            # (T, C)
        w3 = params["conv3_w"].astype(jnp.float32)                        # (C, C, 3, 3)
        weff = jnp.einsum('to,oihw->hwti', w1, w3).reshape(9, T, C)       # (9, T, C)
        beff = (w1 @ params["conv3_b"].astype(jnp.float32).reshape(C, 1)
                + params["conv1_b"].astype(jnp.float32).reshape(T, 1))    # (T, 1)
        bitvals = jnp.array([[1 << k] for k in range(9)], jnp.int32)      # (9, 1)

    HWp_min = _round_up(HW, 128)
    single_pass_ok = (weight_mask and not force_two_pass and tile_hw is None
                      and HWp_min * per_lane <= budget)

    if single_pass_ok:
        # ---- weight_mask=True, whole sample in VMEM: one HBM read of x ----
        HWp = HWp_min
        x_flat = x.reshape(N, C, HW)
        if HWp != HW:
            x_flat = jnp.pad(x_flat, ((0, 0), (0, 0), (0, HWp - HW)))
        tap = _packed_tap_bits(H, W, HWp)
        out_flat, dice_n = pl.pallas_call(
            _make_single_pass_kernel(T, HW, HWp, 1.0 / HW),
            out_shape=(jax.ShapeDtypeStruct((N, C, HWp), x.dtype),
                       jax.ShapeDtypeStruct((N, 1, 128), jnp.float32)),
            grid_spec=pltpu.PrefetchScalarGridSpec(
                num_scalar_prefetch=0, grid=(N,),
                in_specs=[rep((T, C), 1), rep((9, T, C), 1), rep((T, 1), 1),
                          rep((9, 1), 1), rep((1, HWp), 1),
                          pl.BlockSpec((1, C, HWp), lambda n: (n, 0, 0))],
                out_specs=(pl.BlockSpec((1, C, HWp), lambda n: (n, 0, 0)),
                           pl.BlockSpec((1, 1, 128), lambda n: (n, 0, 0)))),
            compiler_params=cparams(("parallel",)),
        )(mt, weff, beff, bitvals, tap, x_flat)
    else:
        # ---- chunked paths: bounded per-step VMEM regardless of feature-map size ----
        if tile_hw is not None:
            assert tile_hw % 128 == 0, "tile_hw must be a multiple of 128"
            tile = tile_hw
        else:
            tile = _choose_tile(HW, per_lane, budget)
        HWp = _round_up(HW, tile)
        K = HWp // tile
        padded = HWp != HW
        x_flat = x.reshape(N, C, HW)
        if padded:
            x_flat = jnp.pad(x_flat, ((0, 0), (0, 0), (0, HWp - HW)))

        x_spec = pl.BlockSpec((1, C, tile), lambda n, h: (n, 0, h))
        out_spec = pl.BlockSpec((1, C, tile), lambda n, h: (n, 0, h))
        dice_spec = pl.BlockSpec((1, 1, 128), lambda n, h: (n, 0, 0))

        if not weight_mask:
            # fused: dice reduction + output map in one pass over x
            out_flat, dice_n = pl.pallas_call(
                _make_fused_sum_kernel(T, HW, tile, padded),
                out_shape=(jax.ShapeDtypeStruct((N, C, HWp), x.dtype),
                           jax.ShapeDtypeStruct((N, 1, 128), jnp.float32)),
                grid_spec=pltpu.PrefetchScalarGridSpec(
                    num_scalar_prefetch=0, grid=(N, K),
                    in_specs=[rep((T, C), 2), x_spec],
                    out_specs=(out_spec, dice_spec),
                    scratch_shapes=[pltpu.VMEM((T, T), jnp.float32)]),
                compiler_params=cparams(("parallel", "arbitrary")),
            )(mt, x_flat)
        else:
            tap = _packed_tap_bits(H, W, HWp)
            # pass 1: per-sample reductions -> token weights + dice
            w_nt, dice_n = pl.pallas_call(
                _make_reduce_kernel(T, HW, tile, 1.0 / HW, padded),
                out_shape=(jax.ShapeDtypeStruct((N, T, 128), jnp.float32),
                           jax.ShapeDtypeStruct((N, 1, 128), jnp.float32)),
                grid_spec=pltpu.PrefetchScalarGridSpec(
                    num_scalar_prefetch=0, grid=(N, K),
                    in_specs=[rep((T, C), 2), rep((9, T, C), 2), rep((T, 1), 2),
                              rep((9, 1), 2),
                              pl.BlockSpec((1, tile), lambda n, h: (0, h)),
                              x_spec],
                    out_specs=(pl.BlockSpec((1, T, 128), lambda n, h: (n, 0, 0)),
                               dice_spec),
                    scratch_shapes=[pltpu.VMEM((T, T), jnp.float32),
                                    pltpu.VMEM((9, C), jnp.float32)]),
                compiler_params=cparams(("parallel", "arbitrary")),
            )(mt, weff, beff, bitvals, tap, x_flat)
            # pass 2: per-chunk output map (fully parallel, lane-dense blocks)
            out_flat = pl.pallas_call(
                _apply_kernel,
                out_shape=jax.ShapeDtypeStruct((N, C, HWp), x.dtype),
                grid_spec=pltpu.PrefetchScalarGridSpec(
                    num_scalar_prefetch=0, grid=(N, K),
                    in_specs=[rep((T, C), 2),
                              pl.BlockSpec((1, T, 128), lambda n, h: (n, 0, 0)),
                              x_spec],
                    out_specs=out_spec),
                compiler_params=cparams(("parallel", "parallel")),
            )(mt, w_nt, x_flat)

    out = out_flat[:, :, :HW].reshape(N, C, H, W)
    mask_loss = jnp.mean(dice_n[:, 0, 0])
    return out, mask_loss


# --------------------------- pure-JAX reference ---------------------------
def mask_module_reference(x, params, weight_mask=True):
    N, C, H, W = x.shape
    T = params["mask_token"].shape[0]
    xf = x.astype(jnp.float32)
    k = xf.reshape(N, C, H * W)
    attn = jax.nn.sigmoid(
        jnp.einsum('tc,nch->nth', params["mask_token"].astype(jnp.float32), k))
    mask = attn.reshape(N, T, H, W)
    out = xf[:, None] * mask[:, :, None]                               # (N, T, C, H, W)
    if weight_mask:
        conv = lax.conv_general_dilated(
            xf, params["conv3_w"].astype(jnp.float32), window_strides=(1, 1),
            padding='SAME', dimension_numbers=('NCHW', 'OIHW', 'NCHW'))
        conv = conv + params["conv3_b"].reshape(1, C, 1, 1)
        avg = conv.mean((2, 3))                                        # (N, C)
        logits = avg @ params["conv1_w"][:, :, 0, 0].T + params["conv1_b"].reshape(1, T)
        probs = jax.nn.softmax(logits, axis=1)                         # (N, T)
        out = out * probs[:, :, None, None, None]
    out = out.sum(1)                                                   # (N, C, H, W)
    flat = attn                                                        # (N, T, HW)
    a = jnp.einsum('nih,njh->nij', flat, flat)
    diag = jnp.einsum('nth,nth->nt', flat, flat)
    b = diag[:, None, :] + 1e-12
    c = diag[:, :, None] + 1e-12
    d = 2.0 * a / (b + c)
    offdiag = 1.0 - jnp.eye(T, dtype=jnp.float32)[None]
    dice = (d * offdiag).sum() / (N * T * (T - 1))
    return out.astype(x.dtype), dice


if __name__ == "__main__":
    key = jax.random.PRNGKey(0)
    N, C, T = 2, 4, 6

    kx, kx2, k1, k2, k3, k4, k5 = jax.random.split(key, 7)
    params = dict(
        mask_token=0.01 * jax.random.normal(k1, (T, C), jnp.float32),
        conv3_w=math.sqrt(2.0 / (3 * 3 * C))
        * jax.random.normal(k2, (C, C, 3, 3), jnp.float32),
        conv3_b=0.05 * jax.random.normal(k3, (C,), jnp.float32),
        conv1_w=math.sqrt(2.0 / (1 * 1 * T))
        * jax.random.normal(k4, (T, C, 1, 1), jnp.float32),
        conv1_b=0.05 * jax.random.normal(k5, (T,), jnp.float32),
    )

    def check(x, weight_mask, **kw):
        out_k, dice_k = mask_module_forward_pallas(x, params, weight_mask=weight_mask, **kw)
        out_k, dice_k = jax.block_until_ready((out_k, dice_k))
        out_r, dice_r = mask_module_reference(x, params, weight_mask=weight_mask)
        assert jnp.allclose(out_k, out_r, rtol=5e-3, atol=1e-4), ("out mismatch", weight_mask, kw)
        assert jnp.allclose(dice_k, dice_r, rtol=5e-3, atol=1e-5), (float(dice_k), float(dice_r), kw)

    x16 = jax.random.normal(kx, (N, C, 16, 16), jnp.float32)      # HW = 256 (128-aligned)
    x10 = jax.random.normal(kx2, (N, C, 10, 10), jnp.float32)     # HW = 100 -> padded to 128

    check(x16, True)                                      # weight_mask=True, single-pass
    check(x16, True, force_two_pass=True, tile_hw=128)    # two-pass fallback, multi-chunk
    check(x16, False)                                     # weight_mask=False, fused single read
    check(x16, False, tile_hw=128)                        # fused, multi-chunk accumulation
    check(x10, True)                                      # padded HW, single-pass + tap-bit masking
    check(x10, False, tile_hw=128)                        # padded HW, fused + Gram masking

    print("KERNEL_OK")
</pallas_src>

<mosaic_0001>
module attributes {stable_mosaic.version = 11 : i64} {
  func.func @kernel(%arg0: i32, %arg1: memref<6x4xf32, #tpu.memory_space<vmem>>, %arg2: memref<9x6x4xf32, #tpu.memory_space<vmem>>, %arg3: memref<6x1xf32, #tpu.memory_space<vmem>>, %arg4: memref<9x1xi32, #tpu.memory_space<vmem>>, %arg5: memref<1x256xi32, #tpu.memory_space<vmem>>, %arg6: memref<1x4x256xf32, #tpu.memory_space<vmem>>, %arg7: memref<1x4x256xf32, #tpu.memory_space<vmem>>, %arg8: memref<1x1x128xf32, #tpu.memory_space<vmem>>) attributes {dimension_semantics = [#tpu.dimension_semantics<parallel>], iteration_bounds = array<i64: 2>, scalar_prefetch = 0 : i64, scratch_operands = 0 : i64, tpu.core_type = #tpu.core_type<tc>, window_params = [{pipeline_mode = #tpu.pipeline_mode<synchronous>, transform_indices = @transform_0, window_bounds = array<i64: 6, 4>}, {pipeline_mode = #tpu.pipeline_mode<synchronous>, transform_indices = @transform_1, window_bounds = array<i64: 9, 6, 4>}, {pipeline_mode = #tpu.pipeline_mode<synchronous>, transform_indices = @transform_2, window_bounds = array<i64: 6, 1>}, {pipeline_mode = #tpu.pipeline_mode<synchronous>, transform_indices = @transform_3, window_bounds = array<i64: 9, 1>}, {pipeline_mode = #tpu.pipeline_mode<synchronous>, transform_indices = @transform_4, window_bounds = array<i64: 1, 256>}, {transform_indices = @transform_5, window_bounds = array<i64: 1, 4, 256>}, {transform_indices = @transform_6, window_bounds = array<i64: 1, 4, 256>}, {transform_indices = @transform_7, window_bounds = array<i64: 1, 1, 128>}]} {
    %c0 = arith.constant 0 : index
    %c0_0 = arith.constant 0 : index
    %c0_1 = arith.constant 0 : index
    %0 = vector.load %arg6[%c0, %c0_0, %c0_1] : memref<1x4x256xf32, #tpu.memory_space<vmem>>, vector<1x4x256xf32>
    %1 = vector.shape_cast %0 : vector<1x4x256xf32> to vector<4x256xf32>
    %c0_2 = arith.constant 0 : index
    %c0_3 = arith.constant 0 : index
    %2 = vector.load %arg1[%c0_2, %c0_3] : memref<6x4xf32, #tpu.memory_space<vmem>>, vector<6x4xf32>
    %cst = arith.constant dense<0.000000e+00> : vector<6x256xf32>
    %3 = tpu.matmul %2, %1, %cst {dimension_numbers = #tpu.dot_dimension_numbers<[1], [0], [0], [1], [0, 0, 1, 1], [], []>} : vector<6x4xf32>, vector<4x256xf32>, vector<6x256xf32> -> vector<6x256xf32>
    %4 = arith.negf %3 : vector<6x256xf32>
    %5 = math.exp %4 : vector<6x256xf32>
    %cst_4 = arith.constant 1.000000e+00 : f32
    %6 = vector.broadcast %cst_4 : f32 to vector<6x256xf32>
    %7 = arith.addf %6, %5 : vector<6x256xf32>
    %8 = arith.divf %6, %7 : vector<6x256xf32>
    %cst_5 = arith.constant dense<0.000000e+00> : vector<6x6xf32>
    %9 = tpu.matmul %8, %8, %cst_5 {dimension_numbers = #tpu.dot_dimension_numbers<[1], [1], [0], [0], [0, 0, 1, 0], [], []>} : vector<6x256xf32>, vector<6x256xf32>, vector<6x6xf32> -> vector<6x6xf32>
    %10 = tpu.iota {dimensions = array<i32: 0>} : vector<6x6xi32>
    %11 = tpu.iota {dimensions = array<i32: 1>} : vector<6x6xi32>
    %12 = arith.cmpi eq, %10, %11 : vector<6x6xi32>
    %13 = arith.extui %12 : vector<6x6xi1> to vector<6x6xi32>
    %14 = arith.sitofp %13 : vector<6x6xi32> to vector<6x6xf32>
    %15 = arith.mulf %9, %14 : vector<6x6xf32>
    %cst_6 = arith.constant dense<0.000000e+00> : vector<6xf32>
    %16 = vector.multi_reduction <add>, %15, %cst_6 [1] : vector<6x6xf32> to vector<6xf32>
    %17 = vector.shape_cast %16 : vector<6xf32> to vector<6x1xf32>
    %18 = arith.mulf %9, %14 : vector<6x6xf32>
    %cst_7 = arith.constant dense<0.000000e+00> : vector<6xf32>
    %19 = vector.multi_reduction <add>, %18, %cst_7 [0] : vector<6x6xf32> to vector<6xf32>
    %20 = vector.shape_cast %19 : vector<6xf32> to vector<1x6xf32>
    %cst_8 = arith.constant 2.000000e+00 : f32
    %21 = vector.broadcast %cst_8 : f32 to vector<6x6xf32>
    %22 = arith.mulf %21, %9 : vector<6x6xf32>
    %23 = vector.broadcast %17 : vector<6x1xf32> to vector<6x6xf32>
    %24 = vector.broadcast %20 : vector<1x6xf32> to vector<6x6xf32>
    %25 = arith.addf %23, %24 : vector<6x6xf32>
    %cst_9 = arith.constant 2.000000e-12 : f32
    %26 = vector.broadcast %cst_9 : f32 to vector<6x6xf32>
    %27 = arith.addf %25, %26 : vector<6x6xf32>
    %28 = arith.divf %22, %27 : vector<6x6xf32>
    %cst_10 = arith.constant 1.000000e+00 : f32
    %29 = vector.broadcast %cst_10 : f32 to vector<6x6xf32>
    %30 = arith.subf %29, %14 : vector<6x6xf32>
    %31 = arith.mulf %28, %30 : vector<6x6xf32>
    %32 = vector.shape_cast %31 : vector<6x6xf32> to vector<1x6x6xf32>
    %cst_11 = arith.constant dense<0.000000e+00> : vector<1xf32>
    %33 = vector.multi_reduction <add>, %32, %cst_11 [1, 2] : vector<1x6x6xf32> to vector<1xf32>
    %34 = vector.shape_cast %33 : vector<1xf32> to vector<1x1x1xf32>
    %35 = vector.extract %34[0, 0, 0] : f32 from vector<1x1x1xf32>
    %cst_12 = arith.constant 0.0333333351 : f32
    %36 = arith.mulf %35, %cst_12 : f32
    %37 = vector.broadcast %36 : f32 to vector<1x1x128xf32>
    %c0_13 = arith.constant 0 : index
    %c0_14 = arith.constant 0 : index
    %c0_15 = arith.constant 0 : index
    %38 = vector.load %arg8[%c0_13, %c0_14, %c0_15] : memref<1x1x128xf32, #tpu.memory_space<vmem>>, vector<1x1x128xf32>
    tpu.vector_store %arg8[%c0_13, %c0_14, %c0_15], %37 {strides = array<i32>} : memref<1x1x128xf32, #tpu.memory_space<vmem>>, vector<1x1x128xf32>,
    %c0_16 = arith.constant 0 : index
    %c0_17 = arith.constant 0 : index
    %39 = vector.load %arg5[%c0_16, %c0_17] : memref<1x256xi32, #tpu.memory_space<vmem>>, vector<1x256xi32>
    %c0_18 = arith.constant 0 : index
    %c0_19 = arith.constant 0 : index
    %40 = vector.load %arg4[%c0_18, %c0_19] : memref<9x1xi32, #tpu.memory_space<vmem>>, vector<9x1xi32>
    %41 = vector.broadcast %39 : vector<1x256xi32> to vector<9x256xi32>
    %42 = vector.broadcast %40 : vector<9x1xi32> to vector<9x256xi32>
    %43 = arith.andi %41, %42 : vector<9x256xi32>
    %c0_i32 = arith.constant 0 : i32
    %44 = vector.broadcast %c0_i32 : i32 to vector<9x256xi32>
    %45 = arith.cmpi sgt, %43, %44 : vector<9x256xi32>
    %46 = arith.extui %45 : vector<9x256xi1> to vector<9x256xi32>
    %47 = arith.sitofp %46 : vector<9x256xi32> to vector<9x256xf32>
    %cst_20 = arith.constant dense<0.000000e+00> : vector<9x4xf32>
    %48 = tpu.matmul %47, %1, %cst_20 {dimension_numbers = #tpu.dot_dimension_numbers<[1], [1], [0], [0], [0, 0, 1, 0], [], []>} : vector<9x256xf32>, vector<4x256xf32>, vector<9x4xf32> -> vector<9x4xf32>
    %c0_21 = arith.constant 0 : index
    %c0_22 = arith.constant 0 : index
    %c0_23 = arith.constant 0 : index
    %49 = vector.load %arg2[%c0_21, %c0_22, %c0_23] : memref<9x6x4xf32, #tpu.memory_space<vmem>>, vector<1x6x4xf32>
    %50 = vector.shape_cast %49 : vector<1x6x4xf32> to vector<6x4xf32>
    %51 = vector.extract_strided_slice %48 {offsets = [0, 0], sizes = [1, 4], strides = [1, 1]} : vector<9x4xf32> to vector<1x4xf32>
    %52 = vector.broadcast %51 : vector<1x4xf32> to vector<6x4xf32>
    %53 = arith.mulf %50, %52 : vector<6x4xf32>
    %c1 = arith.constant 1 : index
    %c0_24 = arith.constant 0 : index
    %c0_25 = arith.constant 0 : index
    %54 = vector.load %arg2[%c1, %c0_24, %c0_25] : memref<9x6x4xf32, #tpu.memory_space<vmem>>, vector<1x6x4xf32>
    %55 = vector.shape_cast %54 : vector<1x6x4xf32> to vector<6x4xf32>
    %56 = vector.extract_strided_slice %48 {offsets = [1, 0], sizes = [1, 4], strides = [1, 1]} : vector<9x4xf32> to vector<1x4xf32>
    %57 = vector.broadcast %56 : vector<1x4xf32> to vector<6x4xf32>
    %58 = arith.mulf %55, %57 : vector<6x4xf32>
    %59 = arith.addf %53, %58 : vector<6x4xf32>
    %c2 = arith.constant 2 : index
    %c0_26 = arith.constant 0 : index
    %c0_27 = arith.constant 0 : index
    %60 = vector.load %arg2[%c2, %c0_26, %c0_27] : memref<9x6x4xf32, #tpu.memory_space<vmem>>, vector<1x6x4xf32>
    %61 = vector.shape_cast %60 : vector<1x6x4xf32> to vector<6x4xf32>
    %62 = vector.extract_strided_slice %48 {offsets = [2, 0], sizes = [1, 4], strides = [1, 1]} : vector<9x4xf32> to vector<1x4xf32>
    %63 = vector.broadcast %62 : vector<1x4xf32> to vector<6x4xf32>
    %64 = arith.mulf %61, %63 : vector<6x4xf32>
    %65 = arith.addf %59, %64 : vector<6x4xf32>
    %c3 = arith.constant 3 : index
    %c0_28 = arith.constant 0 : index
    %c0_29 = arith.constant 0 : index
    %66 = vector.load %arg2[%c3, %c0_28, %c0_29] : memref<9x6x4xf32, #tpu.memory_space<vmem>>, vector<1x6x4xf32>
    %67 = vector.shape_cast %66 : vector<1x6x4xf32> to vector<6x4xf32>
    %68 = vector.extract_strided_slice %48 {offsets = [3, 0], sizes = [1, 4], strides = [1, 1]} : vector<9x4xf32> to vector<1x4xf32>
    %69 = vector.broadcast %68 : vector<1x4xf32> to vector<6x4xf32>
    %70 = arith.mulf %67, %69 : vector<6x4xf32>
    %71 = arith.addf %65, %70 : vector<6x4xf32>
    %c4 = arith.constant 4 : index
    %c0_30 = arith.constant 0 : index
    %c0_31 = arith.constant 0 : index
    %72 = vector.load %arg2[%c4, %c0_30, %c0_31] : memref<9x6x4xf32, #tpu.memory_space<vmem>>, vector<1x6x4xf32>
    %73 = vector.shape_cast %72 : vector<1x6x4xf32> to vector<6x4xf32>
    %74 = vector.extract_strided_slice %48 {offsets = [4, 0], sizes = [1, 4], strides = [1, 1]} : vector<9x4xf32> to vector<1x4xf32>
    %75 = vector.broadcast %74 : vector<1x4xf32> to vector<6x4xf32>
    %76 = arith.mulf %73, %75 : vector<6x4xf32>
    %77 = arith.addf %71, %76 : vector<6x4xf32>
    %c5 = arith.constant 5 : index
    %c0_32 = arith.constant 0 : index
    %c0_33 = arith.constant 0 : index
    %78 = vector.load %arg2[%c5, %c0_32, %c0_33] : memref<9x6x4xf32, #tpu.memory_space<vmem>>, vector<1x6x4xf32>
    %79 = vector.shape_cast %78 : vector<1x6x4xf32> to vector<6x4xf32>
    %80 = vector.extract_strided_slice %48 {offsets = [5, 0], sizes = [1, 4], strides = [1, 1]} : vector<9x4xf32> to vector<1x4xf32>
    %81 = vector.broadcast %80 : vector<1x4xf32> to vector<6x4xf32>
    %82 = arith.mulf %79, %81 : vector<6x4xf32>
    %83 = arith.addf %77, %82 : vector<6x4xf32>
    %c6 = arith.constant 6 : index
    %c0_34 = arith.constant 0 : index
    %c0_35 = arith.constant 0 : index
    %84 = vector.load %arg2[%c6, %c0_34, %c0_35] : memref<9x6x4xf32, #tpu.memory_space<vmem>>, vector<1x6x4xf32>
    %85 = vector.shape_cast %84 : vector<1x6x4xf32> to vector<6x4xf32>
    %86 = vector.extract_strided_slice %48 {offsets = [6, 0], sizes = [1, 4], strides = [1, 1]} : vector<9x4xf32> to vector<1x4xf32>
    %87 = vector.broadcast %86 : vector<1x4xf32> to vector<6x4xf32>
    %88 = arith.mulf %85, %87 : vector<6x4xf32>
    %89 = arith.addf %83, %88 : vector<6x4xf32>
    %c7 = arith.constant 7 : index
    %c0_36 = arith.constant 0 : index
    %c0_37 = arith.constant 0 : index
    %90 = vector.load %arg2[%c7, %c0_36, %c0_37] : memref<9x6x4xf32, #tpu.memory_space<vmem>>, vector<1x6x4xf32>
    %91 = vector.shape_cast %90 : vector<1x6x4xf32> to vector<6x4xf32>
    %92 = vector.extract_strided_slice %48 {offsets = [7, 0], sizes = [1, 4], strides = [1, 1]} : vector<9x4xf32> to vector<1x4xf32>
    %93 = vector.broadcast %92 : vector<1x4xf32> to vector<6x4xf32>
    %94 = arith.mulf %91, %93 : vector<6x4xf32>
    %95 = arith.addf %89, %94 : vector<6x4xf32>
    %c8 = arith.constant 8 : index
    %c0_38 = arith.constant 0 : index
    %c0_39 = arith.constant 0 : index
    %96 = vector.load %arg2[%c8, %c0_38, %c0_39] : memref<9x6x4xf32, #tpu.memory_space<vmem>>, vector<1x6x4xf32>
    %97 = vector.shape_cast %96 : vector<1x6x4xf32> to vector<6x4xf32>
    %98 = vector.extract_strided_slice %48 {offsets = [8, 0], sizes = [1, 4], strides = [1, 1]} : vector<9x4xf32> to vector<1x4xf32>
    %99 = vector.broadcast %98 : vector<1x4xf32> to vector<6x4xf32>
    %100 = arith.mulf %97, %99 : vector<6x4xf32>
    %101 = arith.addf %95, %100 : vector<6x4xf32>
    %c0_40 = arith.constant 0 : index
    %c0_41 = arith.constant 0 : index
    %102 = vector.load %arg3[%c0_40, %c0_41] : memref<6x1xf32, #tpu.memory_space<vmem>>, vector<6x1xf32>
    %cst_42 = arith.constant dense<0.000000e+00> : vector<6xf32>
    %103 = vector.multi_reduction <add>, %101, %cst_42 [1] : vector<6x4xf32> to vector<6xf32>
    %104 = vector.shape_cast %103 : vector<6xf32> to vector<6x1xf32>
    %cst_43 = arith.constant 3.906250e-03 : f32
    %105 = vector.broadcast %cst_43 : f32 to vector<6x1xf32>
    %106 = arith.mulf %105, %104 : vector<6x1xf32>
    %107 = arith.addf %102, %106 : vector<6x1xf32>
    %cst_44 = arith.constant dense<0xFF800000> : vector<1xf32>
    %108 = vector.multi_reduction <maximumf>, %107, %cst_44 [0] : vector<6x1xf32> to vector<1xf32>
    %cst_45 = arith.constant 0xFF800000 : f32
    %109 = vector.broadcast %cst_45 : f32 to vector<1xf32>
    %110 = arith.maximumf %109, %108 : vector<1xf32>
    %111 = vector.shape_cast %110 : vector<1xf32> to vector<1x1xf32>
    %112 = vector.broadcast %111 : vector<1x1xf32> to vector<6x1xf32>
    %113 = arith.subf %107, %112 : vector<6x1xf32>
    %114 = math.exp %113 : vector<6x1xf32>
    %cst_46 = arith.constant dense<0.000000e+00> : vector<1xf32>
    %115 = vector.multi_reduction <add>, %114, %cst_46 [0] : vector<6x1xf32> to vector<1xf32>
    %116 = vector.shape_cast %115 : vector<1xf32> to vector<1x1xf32>
    %117 = vector.broadcast %116 : vector<1x1xf32> to vector<6x1xf32>
    %118 = arith.divf %114, %117 : vector<6x1xf32>
    %119 = vector.broadcast %118 : vector<6x1xf32> to vector<6x256xf32>
    %120 = arith.mulf %8, %119 : vector<6x256xf32>
    %cst_47 = arith.constant dense<0.000000e+00> : vector<256xf32>
    %121 = vector.multi_reduction <add>, %120, %cst_47 [0] : vector<6x256xf32> to vector<256xf32>
    %122 = vector.shape_cast %121 : vector<256xf32> to vector<1x256xf32>
    %123 = vector.broadcast %122 : vector<1x256xf32> to vector<4x256xf32>
    %124 = arith.mulf %1, %123 : vector<4x256xf32>
    %c0_48 = arith.constant 0 : index
    %c0_49 = arith.constant 0 : index
    %c0_50 = arith.constant 0 : index
    %125 = vector.load %arg7[%c0_48, %c0_49, %c0_50] : memref<1x4x256xf32, #tpu.memory_space<vmem>>, vector<1x4x256xf32>
    %126 = vector.shape_cast %125 : vector<1x4x256xf32> to vector<4x256xf32>
    %127 = vector.shape_cast %124 : vector<4x256xf32> to vector<1x4x256xf32>
    tpu.vector_store %arg7[%c0_48, %c0_49, %c0_50], %127 {strides = array<i32>} : memref<1x4x256xf32, #tpu.memory_space<vmem>>, vector<1x4x256xf32>,
    return
  }
  func.func @transform_0(%arg0: i32) -> (i32, i32) {
    %c0_i32 = arith.constant 0 : i32
    %c0_i32_0 = arith.constant 0 : i32
    %c0_i32_1 = arith.constant 0 : i32
    return %c0_i32, %c0_i32_0 : i32, i32
  }
  func.func @transform_1(%arg0: i32) -> (i32, i32, i32) {
    %c0_i32 = arith.constant 0 : i32
    %c0_i32_0 = arith.constant 0 : i32
    %c0_i32_1 = arith.constant 0 : i32
    %c0_i32_2 = arith.constant 0 : i32
    return %c0_i32, %c0_i32_0, %c0_i32_1 : i32, i32, i32
  }
  func.func @transform_2(%arg0: i32) -> (i32, i32) {
    %c0_i32 = arith.constant 0 : i32
    %c0_i32_0 = arith.constant 0 : i32
    %c0_i32_1 = arith.constant 0 : i32
    return %c0_i32, %c0_i32_0 : i32, i32
  }
  func.func @transform_3(%arg0: i32) -> (i32, i32) {
    %c0_i32 = arith.constant 0 : i32
    %c0_i32_0 = arith.constant 0 : i32
    %c0_i32_1 = arith.constant 0 : i32
    return %c0_i32, %c0_i32_0 : i32, i32
  }
  func.func @transform_4(%arg0: i32) -> (i32, i32) {
    %c0_i32 = arith.constant 0 : i32
    %c0_i32_0 = arith.constant 0 : i32
    %c0_i32_1 = arith.constant 0 : i32
    return %c0_i32, %c0_i32_0 : i32, i32
  }
  func.func @transform_5(%arg0: i32) -> (i32, i32, i32) {
    %c0_i32 = arith.constant 0 : i32
    %c0_i32_0 = arith.constant 0 : i32
    %c0_i32_1 = arith.constant 0 : i32
    return %arg0, %c0_i32, %c0_i32_0 : i32, i32, i32
  }
  func.func @transform_6(%arg0: i32) -> (i32, i32, i32) {
    %c0_i32 = arith.constant 0 : i32
    %c0_i32_0 = arith.constant 0 : i32
    %c0_i32_1 = arith.constant 0 : i32
    return %arg0, %c0_i32, %c0_i32_0 : i32, i32, i32
  }
  func.func @transform_7(%arg0: i32) -> (i32, i32, i32) {
    %c0_i32 = arith.constant 0 : i32
    %c0_i32_0 = arith.constant 0 : i32
    %c0_i32_1 = arith.constant 0 : i32
    return %arg0, %c0_i32, %c0_i32_0 : i32, i32, i32
  }
}

</mosaic_0001>

<llo_original>
// kernel: tpu_custom_call.1
$region0: #{tpu_custom_call.1}
  #allocation0 [shape = 'u32[]', space=smem, size = 0x4, offset = 0x4, fixed_abs, tag = 'smem constant byte address 0x4 - core index']
  #allocation1 [shape = 'u32[72,128]{1,0:T(1,128)}', space=vmem, size = 0x9000, scoped, tag = 'internal scratch']
  %s0 = inlined_call_operand.vmem [shape: f32[6,4], index: 0, kind: input, shape index: {}]
  %s1 = inlined_call_operand.vmem [shape: f32[9,6,4], index: 1, kind: input, shape index: {}]
  %s2 = inlined_call_operand.vmem [shape: f32[6,1], index: 2, kind: input, shape index: {}]
  %s3 = inlined_call_operand.vmem [shape: s32[9,1], index: 3, kind: input, shape index: {}]
  %s4 = inlined_call_operand.vmem [shape: s32[1,256], index: 4, kind: input, shape index: {}]
  %s5 = inlined_call_operand.vmem [shape: f32[2,4,256], index: 5, kind: input, shape index: {}]
  %s6 = inlined_call_operand.hbm [shape: f32[2,4,256], index: 6, kind: output, shape index: {0}]
  %s7 = inlined_call_operand.hbm [shape: f32[2,1,128], index: 7, kind: output, shape index: {1}]
  %8 = xla_tuple %s6, %s7
  %s9 = sld [smem:[#allocation0]]
  $region65: #{tpu_custom_call.1} parent=0
    _
  %s11 = ssub.s32 1, %s9
  %s12 = scalar_select 0, %s11, %s9
  $region1: #{tpu_custom_call.1} parent=0
    #allocation2 [shape = 'u8[8192]{0}', space=vmem, size = 0x2000, scoped, tag = 'output window, operand 0']
    #allocation3 [shape = 's32[2]{0}', space=sflag, size = 0x8, scoped, tag = 'scoped memory for tpu_custom_call.1']
    #allocation4 [shape = 'u8[1024]{0}', space=vmem, size = 0x400, scoped, tag = 'output window, operand 1']
    #allocation5 [shape = 's32[2]{0}', space=sflag, size = 0x8, scoped, tag = 'scoped memory for tpu_custom_call.1']
    %13 = vsyncpa [#allocation3], 0
    %s14 = scalar_lea.sflag [#allocation3], 1
    %15 = vsyncpa %s14, 0
    %16 = vsyncpa [#allocation5], 0
    %s17 = scalar_lea.sflag [#allocation5], 1
    %18 = vsyncpa %s17, 0
    loop: start=0, step=1, limit=4
    $region2: #{tpu_custom_call.1} parent=1 // loop_pre_header
      _
    $region3: #{tpu_custom_call.1} parent=1 // loop_header
      %s20 = sphi 0, %s24
      %p21 = scmp.ge.s32.totalorder %s20, 4
      %s28 = sphi 0, %s28
      %s30 = sphi 0, %s28
      %s31 = sphi 0, %s30
      %s45 = sphi 0, %s31
      %s49 = sphi 0, %s49
      %s51 = sphi 0, %s49
      %s52 = sphi 0, %s51
      %s66 = sphi 0, %s52
      %s70 = sphi 0, %s70
      %s72 = sphi 0, %s70
      %s73 = sphi 0, %s72
      %s87 = sphi 0, %s73
      %s91 = sphi 0, %s91
      %s93 = sphi 0, %s91
      %s94 = sphi 0, %s93
      %s108 = sphi 0, %s94
      %s112 = sphi 0, %s112
      %s114 = sphi 0, %s112
      %s115 = sphi 0, %s114
      %s129 = sphi 0, %s115
      %s135 = sphi 0, %s137
      %s138 = sphi 0, %s135
      %s139 = sphi 0, %s138
      %s155 = sphi 0, %s139
      %s161 = sphi 0, %s163
      %s164 = sphi 0, %s161
      %s165 = sphi 0, %s164
      %s181 = sphi 0, %s165
      %s187 = sphi 0, %s189
      %s190 = sphi 0, %s187
      %s191 = sphi 0, %s190
      %s207 = sphi 0, %s191
    $region4: #{tpu_custom_call.1} parent=1 // loop_header_branch
      %23 = sbr.rel (%p21) target = $region8
    $region5: #{tpu_custom_call.1} parent=1 // loop_body
      %s25 = ssub.s32 %s20, 1
      %s26 = ssub.s32 %s20, 2
      %s27 = sadd.s32 %s20, 1
      %s29 = sadd.s32 %s28, 1
      %p32 = scmp.eq.s32.totalorder %s20, 1
      %p33 = scmp.ne.s32.totalorder %s28, %s30
      %p34 = scmp.eq.s32.totalorder %s20, 0
      %p35 = por %p33, %p34
      %p36 = scmp.ne.s32.totalorder %s28, %s30
      %p37 = scmp.eq.s32.totalorder %s25, 1
      %p38 = por %p36, %p37
      %p39 = scmp.ne.s32.totalorder %s30, %s31
      %p40 = scmp.eq.s32.totalorder %s25, 0
      %p41 = por %p39, %p40
      %p42 = scmp.ne.s32.totalorder %s30, %s31
      %p43 = scmp.eq.s32.totalorder %s26, 1
      %p44 = por %p42, %p43
      %p46 = scmp.ne.s32.totalorder %s31, %s45
      %p47 = scmp.eq.s32.totalorder %s26, 0
      %p48 = por %p46, %p47
      %s50 = sadd.s32 %s49, 1
      %p53 = scmp.eq.s32.totalorder %s20, 1
      %p54 = scmp.ne.s32.totalorder %s49, %s51
      %p55 = scmp.eq.s32.totalorder %s20, 0
      %p56 = por %p54, %p55
      %p57 = scmp.ne.s32.totalorder %s49, %s51
      %p58 = scmp.eq.s32.totalorder %s25, 1
      %p59 = por %p57, %p58
      %p60 = scmp.ne.s32.totalorder %s51, %s52
      %p61 = scmp.eq.s32.totalorder %s25, 0
      %p62 = por %p60, %p61
      %p63 = scmp.ne.s32.totalorder %s51, %s52
      %p64 = scmp.eq.s32.totalorder %s26, 1
      %p65 = por %p63, %p64
      %p67 = scmp.ne.s32.totalorder %s52, %s66
      %p68 = scmp.eq.s32.totalorder %s26, 0
      %p69 = por %p67, %p68
      %s71 = sadd.s32 %s70, 1
      %p74 = scmp.eq.s32.totalorder %s20, 1
      %p75 = scmp.ne.s32.totalorder %s70, %s72
      %p76 = scmp.eq.s32.totalorder %s20, 0
      %p77 = por %p75, %p76
      %p78 = scmp.ne.s32.totalorder %s70, %s72
      %p79 = scmp.eq.s32.totalorder %s25, 1
      %p80 = por %p78, %p79
      %p81 = scmp.ne.s32.totalorder %s72, %s73
      %p82 = scmp.eq.s32.totalorder %s25, 0
      %p83 = por %p81, %p82
      %p84 = scmp.ne.s32.totalorder %s72, %s73
      %p85 = scmp.eq.s32.totalorder %s26, 1
      %p86 = por %p84, %p85
      %p88 = scmp.ne.s32.totalorder %s73, %s87
      %p89 = scmp.eq.s32.totalorder %s26, 0
      %p90 = por %p88, %p89
      %s92 = sadd.s32 %s91, 1
      %p95 = scmp.eq.s32.totalorder %s20, 1
      %p96 = scmp.ne.s32.totalorder %s91, %s93
      %p97 = scmp.eq.s32.totalorder %s20, 0
      %p98 = por %p96, %p97
      %p99 = scmp.ne.s32.totalorder %s91, %s93
      %p100 = scmp.eq.s32.totalorder %s25, 1
      %p101 = por %p99, %p100
      %p102 = scmp.ne.s32.totalorder %s93, %s94
      %p103 = scmp.eq.s32.totalorder %s25, 0
      %p104 = por %p102, %p103
      %p105 = scmp.ne.s32.totalorder %s93, %s94
      %p106 = scmp.eq.s32.totalorder %s26, 1
      %p107 = por %p105, %p106
      %p109 = scmp.ne.s32.totalorder %s94, %s108
      %p110 = scmp.eq.s32.totalorder %s26, 0
      %p111 = por %p109, %p110
      %s113 = sadd.s32 %s112, 1
      %p116 = scmp.eq.s32.totalorder %s20, 1
      %p117 = scmp.ne.s32.totalorder %s112, %s114
      %p118 = scmp.eq.s32.totalorder %s20, 0
      %p119 = por %p117, %p118
      %p120 = scmp.ne.s32.totalorder %s112, %s114
      %p121 = scmp.eq.s32.totalorder %s25, 1
      %p122 = por %p120, %p121
      %p123 = scmp.ne.s32.totalorder %s114, %s115
      %p124 = scmp.eq.s32.totalorder %s25, 0
      %p125 = por %p123, %p124
      %p126 = scmp.ne.s32.totalorder %s114, %s115
      %p127 = scmp.eq.s32.totalorder %s26, 1
      %p128 = por %p126, %p127
      %p130 = scmp.ne.s32.totalorder %s115, %s129
      %p131 = scmp.eq.s32.totalorder %s26, 0
      %p132 = por %p130, %p131
      %s133 = ssub.s32 %s20, %s27
      %p134 = scmp.eq.s32.totalorder %s133, 0
      %s136 = sadd.s32 %s135, 1
      %s137 = scalar_select %p134, %s135, %s136
      %p140 = pneg %p134
      %p141 = scmp.eq.s32.totalorder %s20, 1
      %p142 = por %p140, %p141
      %p143 = scmp.ne.s32.totalorder %s135, %s138
      %p144 = scmp.eq.s32.totalorder %s20, 0
      %p145 = por %p143, %p144
      %p146 = scmp.ne.s32.totalorder %s135, %s138
      %p147 = scmp.eq.s32.totalorder %s25, 1
      %p148 = por %p146, %p147
      %p149 = scmp.ne.s32.totalorder %s138, %s139
      %p150 = scmp.eq.s32.totalorder %s25, 0
      %p151 = por %p149, %p150
      %p152 = scmp.ne.s32.totalorder %s138, %s139
      %p153 = scmp.eq.s32.totalorder %s26, 1
      %p154 = por %p152, %p153
      %p156 = scmp.ne.s32.totalorder %s139, %s155
      %p157 = scmp.eq.s32.totalorder %s26, 0
      %p158 = por %p156, %p157
      %s159 = ssub.s32 %s20, %s27
      %p160 = scmp.eq.s32.totalorder %s159, 0
      %s162 = sadd.s32 %s161, 1
      %s163 = scalar_select %p160, %s161, %s162
      %p166 = pneg %p160
      %p167 = scmp.eq.s32.totalorder %s20, 1
      %p168 = por %p166, %p167
      %p169 = scmp.ne.s32.totalorder %s161, %s164
      %p170 = scmp.eq.s32.totalorder %s20, 0
      %p171 = por %p169, %p170
      %p172 = scmp.ne.s32.totalorder %s161, %s164
      %p173 = scmp.eq.s32.totalorder %s25, 1
      %p174 = por %p172, %p173
      %p175 = scmp.ne.s32.totalorder %s164, %s165
      %p176 = scmp.eq.s32.totalorder %s25, 0
      %p177 = por %p175, %p176
      %p178 = scmp.ne.s32.totalorder %s164, %s165
      %p179 = scmp.eq.s32.totalorder %s26, 1
      %p180 = por %p178, %p179
      %p182 = scmp.ne.s32.totalorder %s165, %s181
      %p183 = scmp.eq.s32.totalorder %s26, 0
      %p184 = por %p182, %p183
      %s185 = ssub.s32 %s20, %s27
      %p186 = scmp.eq.s32.totalorder %s185, 0
      %s188 = sadd.s32 %s187, 1
      %s189 = scalar_select %p186, %s187, %s188
      %p192 = pneg %p186
      %p193 = scmp.eq.s32.totalorder %s20, 1
      %p194 = por %p192, %p193
      %p195 = scmp.ne.s32.totalorder %s187, %s190
      %p196 = scmp.eq.s32.totalorder %s20, 0
      %p197 = por %p195, %p196
      %p198 = scmp.ne.s32.totalorder %s187, %s190
      %p199 = scmp.eq.s32.totalorder %s25, 1
      %p200 = por %p198, %p199
      %p201 = scmp.ne.s32.totalorder %s190, %s191
      %p202 = scmp.eq.s32.totalorder %s25, 0
      %p203 = por %p201, %p202
      %p204 = scmp.ne.s32.totalorder %s190, %s191
      %p205 = scmp.eq.s32.totalorder %s26, 1
      %p206 = por %p204, %p205
      %p208 = scmp.ne.s32.totalorder %s191, %s207
      %p209 = scmp.eq.s32.totalorder %s26, 0
      %p210 = por %p208, %p209
      %p211 = scmp.le.s32.totalorder 1, %s20
      %p212 = scmp.lt.s32.totalorder %s20, 3
      %p213 = pnand %p211, %p212
      %p214 = pneg %p213
      // Predicated region
      $region9: #{tpu_custom_call.1} parent=5 // pred_check
        _
      $region10: #{tpu_custom_call.1} parent=5 // pred_check_branch
        %216 = sbr.rel (%p213) target = $region12
      $region11: #{tpu_custom_call.1} parent=5 // pred_region
        %s217 = ssub.s32 %s20, 1
        // Predicated region
        $region13: #{tpu_custom_call.1} parent=11 // pred_check
          %p218 = pneg %p41
        $region14: #{tpu_custom_call.1} parent=11 // pred_check_branch
          %220 = sbr.rel (%p218) target = $region16
        $region15: #{tpu_custom_call.1} parent=11 // pred_region
          _
        $region16: #{tpu_custom_call.1} parent=11 // pred_fallthru
          _
        // Predicated region
        $region17: #{tpu_custom_call.1} parent=11 // pred_check
          %p221 = pneg %p62
        $region18: #{tpu_custom_call.1} parent=11 // pred_check_branch
          %223 = sbr.rel (%p221) target = $region20
        $region19: #{tpu_custom_call.1} parent=11 // pred_region
          _
        $region20: #{tpu_custom_call.1} parent=11 // pred_fallthru
          _
        // Predicated region
        $region21: #{tpu_custom_call.1} parent=11 // pred_check
          %p224 = pneg %p83
        $region22: #{tpu_custom_call.1} parent=11 // pred_check_branch
          %226 = sbr.rel (%p224) target = $region24
        $region23: #{tpu_custom_call.1} parent=11 // pred_region
          _
        $region24: #{tpu_custom_call.1} parent=11 // pred_fallthru
          _
        // Predicated region
        $region25: #{tpu_custom_call.1} parent=11 // pred_check
          %p227 = pneg %p104
        $region26: #{tpu_custom_call.1} parent=11 // pred_check_branch
          %229 = sbr.rel (%p227) target = $region28
        $region27: #{tpu_custom_call.1} parent=11 // pred_region
          _
        $region28: #{tpu_custom_call.1} parent=11 // pred_fallthru
          _
        // Predicated region
        $region29: #{tpu_custom_call.1} parent=11 // pred_check
          %p230 = pneg %p125
        $region30: #{tpu_custom_call.1} parent=11 // pred_check_branch
          %232 = sbr.rel (%p230) target = $region32
        $region31: #{tpu_custom_call.1} parent=11 // pred_region
          _
        $region32: #{tpu_custom_call.1} parent=11 // pred_fallthru
          _
      $region12: #{tpu_custom_call.1} parent=5 // pred_fallthru
        _
      %p233 = scmp.lt.s32.totalorder %s20, 2
      // Predicated region
      $region33: #{tpu_custom_call.1} parent=5 // pred_check
        %p234 = pneg %p233
      $region34: #{tpu_custom_call.1} parent=5 // pred_check_branch
        %236 = sbr.rel (%p234) target = $region36
      $region35: #{tpu_custom_call.1} parent=5 // pred_region
        // Predicated region
        $region37: #{tpu_custom_call.1} parent=35 // pred_check
          %p237 = pneg %p145
        $region38: #{tpu_custom_call.1} parent=35 // pred_check_branch
          %239 = sbr.rel (%p237) target = $region40
        $region39: #{tpu_custom_call.1} parent=35 // pred_region
          %p240 = scmp.lt.s32.totalorder %s20, 1
          %s241 = scalar_select %p240, %s20, 1
          %s242 = smul.addr %s241, 2
          %s243 = smul.addr %s242, 4
          %s244 = scalar_lea.vmem %s5, %s243
        $region40: #{tpu_custom_call.1} parent=35 // pred_fallthru
          _
      $region36: #{tpu_custom_call.1} parent=5 // pred_fallthru
        _
      %p245 = scmp.le.s32.totalorder 1, %s20
      %p246 = scmp.lt.s32.totalorder %s20, 3
      %p247 = pnand %p245, %p246
      %p248 = pneg %p247
      // Predicated region
      $region41: #{tpu_custom_call.1} parent=5 // pred_check
        _
      $region42: #{tpu_custom_call.1} parent=5 // pred_check_branch
        %250 = sbr.rel (%p247) target = $region44
      $region43: #{tpu_custom_call.1} parent=5 // pred_region
        %s251 = ssub.s32 %s20, 1
        %p252 = pneg %p41
        %p253 = pneg %p38
        %p254 = pneg %p62
        %p255 = pneg %p59
        %p256 = pneg %p83
        %p257 = pneg %p80
        %p258 = pneg %p104
        %p259 = pneg %p101
        %p260 = pneg %p125
        %p261 = pneg %p122
        %p262 = scmp.lt.s32.totalorder %s25, 1
        %s263 = scalar_select %p262, %s25, 1
        %s264 = smul.addr %s263, 2
        %s265 = smul.addr %s264, 4
        %s266 = scalar_lea.vmem %s5, %s265
        %p267 = pneg %p151
        %p268 = pneg %p148
        %p269 = pneg %p177
        %p270 = pneg %p174
        %s271 = sand.u32 %s164, 1
        %s272 = scalar_lea.sflag [#allocation3], %s271
        %s273 = sand.u32 %s164, 1
        %s274 = smul.addr %s273, 8
        %s275 = scalar_lea.vmem [#allocation2], %s274
        %p276 = pneg %p203
        %p277 = pneg %p200
        %s278 = sand.u32 %s190, 1
        %s279 = scalar_lea.sflag [#allocation5], %s278
        %s280 = sand.u32 %s190, 1
        %s281 = scalar_lea.vmem [#allocation4], %s280
        %p282 = scmp.lt.s32.totalorder %s25, 1
        %s283 = scalar_select %p282, %s25, 1
        %s284 = smul.addr %s283, 2
        %s285 = smul.addr %s284, 4
        %s286 = scalar_lea.vmem %s5, %s285
        %v287 = vld [vmem:[%s286] sm:$0xff]
        %v288 = vld [vmem:[%s0] sm:$0x3f]
        %290 = vst [vmem:[#allocation1] ss:$2 sm:$0xff] %v287
        %v291 = vld.sshfl [vmem:[#allocation1] sm:$0xff pattern:$0x75316420]
        %v292 = vld.sshfl [vmem:[#allocation1 + $0x8] sm:$0xff pattern:$0x75316420]
        %vm293 = vcmask 31744
        %v295 = vsel %vm293, %v288, 0
        %vm297 = vcmask 1043456
        %v298 = vsel %vm297, %v291, 0
        %v300 = vsel %vm297, %v292, 0
        %302 = vmatpush.msra.mxu0 0.0
        %303 = vmatpush.msra.mxu0 0.0
        %304 = vmatpush.msra.mxu0 0.0
        %305 = vmatpush.msra.mxu0 0.0
        %306 = vmatpush.msra.mxu0 0.0
        %307 = vmatpush.msra.mxu0 0.0
        %308 = vmatpush.msra.mxu0 0.0
        %309 = vmatpush.msra.mxu0 0.0
        %310 = vmatpush.msra.mxu0 0.0
        %311 = vmatpush.msra.mxu0 0.0
        %312 = vmatpush.msra.mxu0 0.0
        %313 = vmatpush.msra.mxu0 0.0
        %314 = vmatpush.msra.mxu0 0.0
        %315 = vmatpush.msra.mxu0 0.0
        %316 = vmatpush.msra.mxu0 0.0
        %317 = vmatpush.msra.mxu0 %v298
        %318 = vmatmul.f32.gmra.mxu0 %v295
        %v319 = vpop.f32.mrf.mxu0
        %v320 = vadd.f32 0.0, %v319
        %321 = vdwg.mxu0
        %322 = vmatpush.msra.mxu0 0.0
        %323 = vmatpush.msra.mxu0 0.0
        %324 = vmatpush.msra.mxu0 0.0
        %325 = vmatpush.msra.mxu0 0.0
        %326 = vmatpush.msra.mxu0 0.0
        %327 = vmatpush.msra.mxu0 0.0
        %328 = vmatpush.msra.mxu0 0.0
        %329 = vmatpush.msra.mxu0 0.0
        %330 = vmatpush.msra.mxu0 0.0
        %331 = vmatpush.msra.mxu0 0.0
        %332 = vmatpush.msra.mxu0 0.0
        %333 = vmatpush.msra.mxu0 0.0
        %334 = vmatpush.msra.mxu0 0.0
        %335 = vmatpush.msra.mxu0 0.0
        %336 = vmatpush.msra.mxu0 0.0
        %337 = vmatpush.msra.mxu0 %v300
        %338 = vmatmul.f32.gmra.mxu0 %v295
        %v339 = vpop.f32.mrf.mxu0
        %v340 = vadd.f32 0.0, %v339
        %341 = vdwg.mxu0
        %v342 = vxor.u32 %v320, 2147483648
        %v343 = vxor.u32 %v340, 2147483648
        %v344 = vmul.f32 %v342, 1.442695
        %v345 = vpow.pop %v344
        %v346 = vmul.f32 %v343, 1.442695
        %v347 = vpow.pop %v346
        %v348 = vadd.f32 %v345, 1.0
        %v349 = vadd.f32 %v347, 1.0
        %v350 = vrcp.pop %v348
        %v351 = vmul.f32 %v348, %v350
        %v352 = vsub.f32 1.0, %v351
        %v353 = vmul.f32 %v350, %v352
        %v354 = vadd.f32 %v350, %v353
        %vm355 = vweird.f32 %v348
        %vm356 = vweird.f32 %v350
        %vm357 = vmor %vm355, %vm356
        %v358 = vsel %vm357, %v350, %v354
        %v359 = vand.u32 2147483647, %v348
        %vm360 = vcmp.eq.f32.partialorder %v359, 8.507059e+37
        %v361 = vand.u32 %v348, 2147483648
        %v362 = vor.u32 1.1754944e-38, %v361
        %v363 = vsel %vm360, %v362, %v358
        %v364 = vmul.f32 1.0, %v363
        %v365 = vrcp.pop %v349
        %v366 = vmul.f32 %v349, %v365
        %v367 = vsub.f32 1.0, %v366
        %v368 = vmul.f32 %v365, %v367
        %v369 = vadd.f32 %v365, %v368
        %vm370 = vweird.f32 %v349
        %vm371 = vweird.f32 %v365
        %vm372 = vmor %vm370, %vm371
        %v373 = vsel %vm372, %v365, %v369
        %v374 = vand.u32 2147483647, %v349
        %vm375 = vcmp.eq.f32.partialorder %v374, 8.507059e+37
        %v376 = vand.u32 %v349, 2147483648
        %v377 = vor.u32 1.1754944e-38, %v376
        %v378 = vsel %vm375, %v377, %v373
        %v379 = vmul.f32 1.0, %v378
        %380 = vmatpush.xpose.msra.mxu0 0.0
        %381 = vmatpush.xpose.msra.mxu0 0.0
        %382 = vmatpush.xpose.msra.mxu0 0.0
        %383 = vmatpush.xpose.msra.mxu0 0.0
        %384 = vmatpush.xpose.msra.mxu0 0.0
        %385 = vmatpush.xpose.msra.mxu0 0.0
        %386 = vmatpush.xpose.msra.mxu0 0.0
        %387 = vmatpush.xpose.msra.mxu0 0.0
        %388 = vmatpush.xpose.msra.mxu0 0.0
        %389 = vmatpush.xpose.msra.mxu0 0.0
        %390 = vmatpush.xpose.msra.mxu0 0.0
        %391 = vmatpush.xpose.msra.mxu0 0.0
        %392 = vmatpush.xpose.msra.mxu0 0.0
        %393 = vmatpush.xpose.msra.mxu0 0.0
        %394 = vmatpush.xpose.msra.mxu0 0.0
        %395 = vmatpush.xpose.msra.mxu0 %v364
        %396 = vmatmul.f32.gmra.mxu0 %v364
        %v397 = vpop.f32.mrf.mxu0
        %v398 = vadd.f32 0.0, %v397
        %399 = vdwg.mxu0
        %400 = vmatpush.xpose.msra.mxu0 0.0
        %401 = vmatpush.xpose.msra.mxu0 0.0
        %402 = vmatpush.xpose.msra.mxu0 0.0
        %403 = vmatpush.xpose.msra.mxu0 0.0
        %404 = vmatpush.xpose.msra.mxu0 0.0
        %405 = vmatpush.xpose.msra.mxu0 0.0
        %406 = vmatpush.xpose.msra.mxu0 0.0
        %407 = vmatpush.xpose.msra.mxu0 0.0
        %408 = vmatpush.xpose.msra.mxu0 0.0
        %409 = vmatpush.xpose.msra.mxu0 0.0
        %410 = vmatpush.xpose.msra.mxu0 0.0
        %411 = vmatpush.xpose.msra.mxu0 0.0
        %412 = vmatpush.xpose.msra.mxu0 0.0
        %413 = vmatpush.xpose.msra.mxu0 0.0
        %414 = vmatpush.xpose.msra.mxu0 0.0
        %415 = vmatpush.xpose.msra.mxu0 %v379
        %416 = vmatmul.f32.gmra.mxu0 %v379
        %v417 = vpop.f32.mrf.mxu0
        %v418 = vadd.f32 %v398, %v417
        %419 = vdwg.mxu0
        %v420 = vlaneseq
        %v421 = vshrl.u32 %v420, 7
        %v422 = vlaneseq
        %v423 = vand.u32 %v422, 127
        %vm424 = vcmp.eq.s32.totalorder %v421, %v423
        %v425 = vsel %vm424, 1, 0
        %v426 = vcvt.s32.f32 %v425
        %v427 = vmul.f32 %v418, %v426
        %vm428 = vcmask 46080
        %v429 = vsel %vm428, %v427, 0.0
        %430 = vadd.xlane.f32.xlu0 %v429
        %v431 = vpop.xlane.xlu0 %430
        %v432 = vrot.slane %v429, 4
        %v433 = vadd.f32 %v429, %v432
        %v434 = vrot.slane %v433, 2
        %v435 = vadd.f32 %v433, %v434
        %v436 = vrot.slane %v435, 1
        %v437 = vadd.f32 %v435, %v436
        %v438 = vmul.f32 %v418, 2.0
        %v439 = vadd.f32 %v431, %v437
        %v440 = vadd.f32 %v439, 2e-12
        %v441 = vrcp.pop %v440
        %v442 = vmul.f32 %v440, %v441
        %v443 = vsub.f32 1.0, %v442
        %v444 = vmul.f32 %v441, %v443
        %v445 = vadd.f32 %v441, %v444
        %vm446 = vweird.f32 %v440
        %vm447 = vweird.f32 %v441
        %vm448 = vmor %vm446, %vm447
        %v449 = vsel %vm448, %v441, %v445
        %v450 = vand.u32 2147483647, %v440
        %vm451 = vcmp.eq.f32.partialorder %v450, 8.507059e+37
        %v452 = vand.u32 %v440, 2147483648
        %v453 = vor.u32 1.1754944e-38, %v452
        %v454 = vsel %vm451, %v453, %v449
        %v455 = vmul.f32 %v438, %v454
        %v456 = vsub.f32 1.0, %v426
        %v457 = vmul.f32 %v455, %v456
        %v458 = vsel %vm428, %v457, 0.0
        %459 = vadd.xlane.f32.xlu0 %v458
        %v460 = vpop.xlane.xlu0 %459
        %v461 = vrot.slane %v460, 4
        %v462 = vadd.f32 %v460, %v461
        %v463 = vrot.slane %v462, 2
        %v464 = vadd.f32 %v462, %v463
        %v465 = vrot.slane %v464, 1
        %v466 = vadd.f32 %v464, %v465
        %s467 = vtos %v466
        %s468 = smul.f32 %s467, 0.033333335
        %v469 = vstv %s468
        %470 = vst [vmem:[%s281] sm:$0x1] %v469
        %v471 = vld [vmem:[%s4] sm:$0x3]
        %v472 = vld [vmem:[%s3] sm:$0xff]
        %v473 = vld [vmem:[%s3 + $0x8] sm:$0x1]
        %v474 = vperm.slane %v471, 0
        %v475 = vperm.slane %v471, 1
        %476 = vset.pattern.permute.xlu0 0
        %477 = vperm.xlu0 %476, %v472
        %v478 = vpop.permute.xlu0 %477
        %479 = vset.pattern.permute.xlu0 0
        %480 = vperm.xlu0 %479, %v473
        %v481 = vpop.permute.xlu0 %480
        %v482 = vand.u32 %v474, %v478
        %v483 = vand.u32 %v475, %v478
        %v484 = vand.u32 %v474, %v481
        %v485 = vand.u32 %v475, %v481
        %vm486 = vcmp.gt.s32.totalorder %v482, 0
        %vm487 = vcmp.gt.s32.totalorder %v483, 0
        %vm488 = vcmp.gt.s32.totalorder %v484, 0
        %vm489 = vcmp.gt.s32.totalorder %v485, 0
        %v490 = vsel %vm486, 1, 0
        %v491 = vsel %vm487, 1, 0
        %v492 = vsel %vm488, 1, 0
        %v493 = vsel %vm489, 1, 0
        %v494 = vcvt.s32.f32 %v490
        %v495 = vcvt.s32.f32 %v491
        %v496 = vcvt.s32.f32 %v492
        %v497 = vcvt.s32.f32 %v493
        %498 = vst [vmem:[#allocation1] ss:$2 sm:$0xff] %v287
        %v499 = vld.sshfl [vmem:[#allocation1] sm:$0xff pattern:$0x75316420]
        %v500 = vld.sshfl [vmem:[#allocation1 + $0x8] sm:$0xff pattern:$0x75316420]
        %503 = vmatpush.xpose.msra.mxu0 0.0
        %504 = vmatpush.xpose.msra.mxu0 0.0
        %505 = vmatpush.xpose.msra.mxu0 0.0
        %506 = vmatpush.xpose.msra.mxu0 0.0
        %507 = vmatpush.xpose.msra.mxu0 0.0
        %508 = vmatpush.xpose.msra.mxu0 0.0
        %509 = vmatpush.xpose.msra.mxu0 0.0
        %510 = vmatpush.xpose.msra.mxu0 0.0
        %511 = vmatpush.xpose.msra.mxu0 0.0
        %512 = vmatpush.xpose.msra.mxu0 0.0
        %513 = vmatpush.xpose.msra.mxu0 0.0
        %514 = vmatpush.xpose.msra.mxu0 0.0
        %515 = vmatpush.xpose.msra.mxu0 0.0
        %516 = vmatpush.xpose.msra.mxu0 0.0
        %517 = vmatpush.xpose.msra.mxu0 0.0
        %518 = vmatpush.xpose.msra.mxu0 %v499
        %519 = vmatmul.f32.gmra.mxu0 %v494
        %v520 = vpop.f32.mrf.mxu0
        %v521 = vadd.f32 0.0, %v520
        %522 = vmatmul.f32.gmra.mxu0 %v496
        %v523 = vpop.f32.mrf.mxu0
        %v524 = vadd.f32 0.0, %v523
        %525 = vdwg.mxu0
        %526 = vmatpush.xpose.msra.mxu0 0.0
        %527 = vmatpush.xpose.msra.mxu0 0.0
        %528 = vmatpush.xpose.msra.mxu0 0.0
        %529 = vmatpush.xpose.msra.mxu0 0.0
        %530 = vmatpush.xpose.msra.mxu0 0.0
        %531 = vmatpush.xpose.msra.mxu0 0.0
        %532 = vmatpush.xpose.msra.mxu0 0.0
        %533 = vmatpush.xpose.msra.mxu0 0.0
        %534 = vmatpush.xpose.msra.mxu0 0.0
        %535 = vmatpush.xpose.msra.mxu0 0.0
        %536 = vmatpush.xpose.msra.mxu0 0.0
        %537 = vmatpush.xpose.msra.mxu0 0.0
        %538 = vmatpush.xpose.msra.mxu0 0.0
        %539 = vmatpush.xpose.msra.mxu0 0.0
        %540 = vmatpush.xpose.msra.mxu0 0.0
        %541 = vmatpush.xpose.msra.mxu0 %v500
        %542 = vmatmul.f32.gmra.mxu0 %v495
        %v543 = vpop.f32.mrf.mxu0
        %v544 = vadd.f32 %v521, %v543
        %545 = vmatmul.f32.gmra.mxu0 %v497
        %v546 = vpop.f32.mrf.mxu0
        %v547 = vadd.f32 %v524, %v546
        %548 = vdwg.mxu0
        %v549 = vld [vmem:[%s1] sm:$0x3f]
        %v550 = vperm.slane %v544, 0
        %v551 = vmul.f32 %v549, %v550
        %s552 = scalar_lea.vmem %s1, 8
        %v553 = vld [vmem:[%s552] sm:$0x3f]
        %v554 = vperm.slane %v544, 1
        %v555 = vmul.f32 %v553, %v554
        %v556 = vadd.f32 %v551, %v555
        %s557 = scalar_lea.vmem %s1, 16
        %v558 = vld [vmem:[%s557] sm:$0x3f]
        %v559 = vperm.slane %v544, 2
        %v560 = vmul.f32 %v558, %v559
        %v561 = vadd.f32 %v556, %v560
        %s562 = scalar_lea.vmem %s1, 24
        %v563 = vld [vmem:[%s562] sm:$0x3f]
        %v564 = vperm.slane %v544, 3
        %v565 = vmul.f32 %v563, %v564
        %v566 = vadd.f32 %v561, %v565
        %s567 = scalar_lea.vmem %s1, 32
        %v568 = vld [vmem:[%s567] sm:$0x3f]
        %v569 = vperm.slane %v544, 4
        %v570 = vmul.f32 %v568, %v569
        %v571 = vadd.f32 %v566, %v570
        %s572 = scalar_lea.vmem %s1, 40
        %v573 = vld [vmem:[%s572] sm:$0x3f]
        %v574 = vperm.slane %v544, 5
        %v575 = vmul.f32 %v573, %v574
        %v576 = vadd.f32 %v571, %v575
        %s577 = scalar_lea.vmem %s1, 48
        %v578 = vld [vmem:[%s577] sm:$0x3f]
        %v579 = vperm.slane %v544, 6
        %v580 = vmul.f32 %v578, %v579
        %v581 = vadd.f32 %v576, %v580
        %s582 = scalar_lea.vmem %s1, 56
        %v583 = vld [vmem:[%s582] sm:$0x3f]
        %v584 = vperm.slane %v544, 7
        %v585 = vmul.f32 %v583, %v584
        %v586 = vadd.f32 %v581, %v585
        %s587 = scalar_lea.vmem %s1, 64
        %v588 = vld [vmem:[%s587] sm:$0x3f]
        %v589 = vperm.slane %v547, 0
        %v590 = vmul.f32 %v588, %v589
        %v591 = vadd.f32 %v586, %v590
        %v592 = vld [vmem:[%s2] sm:$0x3f]
        %vm593 = vcmask 29696
        %v594 = vsel %vm593, %v591, 0.0
        %595 = vadd.xlane.f32.xlu0 %v594
        %v596 = vpop.xlane.xlu0 %595
        %v597 = vmul.f32 %v596, 0.00390625
        %v598 = vadd.f32 %v592, %v597
        %vm599 = vcmask 5120
        %v600 = vsel %vm599, %v598, -inf
        %v601 = vrot.slane %v600, 4
        %v602 = vmax.f32 %v600, %v601
        %v603 = vrot.slane %v602, 2
        %v604 = vmax.f32 %v602, %v603
        %v605 = vrot.slane %v604, 1
        %v606 = vmax.f32 %v604, %v605
        %v607 = vsub.f32 %v598, %v606
        %v608 = vmul.f32 %v607, 1.442695
        %v609 = vpow.pop %v608
        %v610 = vsel %vm599, %v609, 0.0
        %v611 = vrot.slane %v610, 4
        %v612 = vadd.f32 %v610, %v611
        %v613 = vrot.slane %v612, 2
        %v614 = vadd.f32 %v612, %v613
        %v615 = vrot.slane %v614, 1
        %v616 = vadd.f32 %v614, %v615
        %v617 = vrcp.pop %v616
        %v618 = vmul.f32 %v616, %v617
        %v619 = vsub.f32 1.0, %v618
        %v620 = vmul.f32 %v617, %v619
        %v621 = vadd.f32 %v617, %v620
        %vm622 = vweird.f32 %v616
        %vm623 = vweird.f32 %v617
        %vm624 = vmor %vm622, %vm623
        %v625 = vsel %vm624, %v617, %v621
        %v626 = vand.u32 2147483647, %v616
        %vm627 = vcmp.eq.f32.partialorder %v626, 8.507059e+37
        %v628 = vand.u32 %v616, 2147483648
        %v629 = vor.u32 1.1754944e-38, %v628
        %v630 = vsel %vm627, %v629, %v625
        %v631 = vmul.f32 %v609, %v630
        %633 = vset.pattern.permute.xlu0 0
        %634 = vperm.xlu0 %633, %v631
        %v635 = vpop.permute.xlu0 %634
        %v637 = vmul.f32 %v364, %v635
        %v638 = vmul.f32 %v379, %v635
        %vm639 = vcmask 1045504
        %v640 = vsel %vm639, %v637, 0.0
        %v641 = vrot.slane %v640, 4
        %v642 = vadd.f32 %v640, %v641
        %v643 = vrot.slane %v642, 2
        %v644 = vadd.f32 %v642, %v643
        %v645 = vrot.slane %v644, 1
        %v646 = vadd.f32 %v644, %v645
        %v647 = vsel %vm639, %v638, 0.0
        %v648 = vrot.slane %v647, 4
        %v649 = vadd.f32 %v647, %v648
        %v650 = vrot.slane %v649, 2
        %v651 = vadd.f32 %v649, %v650
        %v652 = vrot.slane %v651, 1
        %v653 = vadd.f32 %v651, %v652
        %v656 = vrot.slane %v653, 4
        %v657 = vsel %vm297, %v646, %v656
        %v659 = vmul.f32 %v287, %v657
        %660 = vst [vmem:[%s275] sm:$0xff] %v659
        %s661 = sand.u32 %s164, 1
        %s662 = scalar_lea.sflag [#allocation3], %s661
        %s663 = sand.u32 %s164, 1
        %s664 = smul.addr %s663, 8
        %s665 = scalar_lea.vmem [#allocation2], %s664
        %s666 = sand.u32 %s190, 1
        %s667 = scalar_lea.sflag [#allocation5], %s666
        %s668 = sand.u32 %s190, 1
        %s669 = scalar_lea.vmem [#allocation4], %s668
        // Predicated region
        $region45: #{tpu_custom_call.1} parent=43 // pred_check
          %p670 = pneg %p174
        $region46: #{tpu_custom_call.1} parent=43 // pred_check_branch
          %672 = sbr.rel (%p670) target = $region48
        $region47: #{tpu_custom_call.1} parent=43 // pred_region
          %674 = vsyncadd %s662, 0
          %s675 = smul.addr %s25, 2
          %s676 = smul.addr %s675, 4
          %s677 = scalar_lea.hbm %s6, %s676
          %s679 = sshll.u32 %s665, 4
          %s680 = int_to_ptr.vmem [resolvable:$true] %s679
          %s681 = sshll.u32 %s677, 4
          %s682 = int_to_ptr.hbm [resolvable:$true] %s681
          %684 = dma.vmem_to_hbm [thread:$0]  %s680, 128, %s682, %s662
        $region48: #{tpu_custom_call.1} parent=43 // pred_fallthru
          _
        // Predicated region
        $region49: #{tpu_custom_call.1} parent=43 // pred_check
          %p685 = pneg %p200
        $region50: #{tpu_custom_call.1} parent=43 // pred_check_branch
          %687 = sbr.rel (%p685) target = $region52
        $region51: #{tpu_custom_call.1} parent=43 // pred_region
          %689 = vsyncadd %s667, 0
          %s690 = scalar_lea.hbm %s7, %s25
          %s692 = sshll.u32 %s669, 4
          %s693 = int_to_ptr.vmem [resolvable:$true] %s692
          %s694 = sshll.u32 %s690, 4
          %s695 = int_to_ptr.hbm [resolvable:$true] %s694
          %697 = dma.vmem_to_hbm [thread:$0]  %s693, 16, %s695, %s667
        $region52: #{tpu_custom_call.1} parent=43 // pred_fallthru
          _
      $region44: #{tpu_custom_call.1} parent=5 // pred_fallthru
        _
      %p698 = scmp.le.s32.totalorder 2, %s20
      // Predicated region
      $region53: #{tpu_custom_call.1} parent=5 // pred_check
        %p699 = pneg %p698
      $region54: #{tpu_custom_call.1} parent=5 // pred_check_branch
        %701 = sbr.rel (%p699) target = $region56
      $region55: #{tpu_custom_call.1} parent=5 // pred_region
        %s702 = ssub.s32 %s20, 2
        // Predicated region
        $region57: #{tpu_custom_call.1} parent=55 // pred_check
          %p703 = pneg %p180
        $region58: #{tpu_custom_call.1} parent=55 // pred_check_branch
          %705 = sbr.rel (%p703) target = $region60
        $region59: #{tpu_custom_call.1} parent=55 // pred_region
          %s706 = sand.u32 %s165, 1
          %s707 = scalar_lea.sflag [#allocation3], %s706
          %s708 = sand.u32 %s165, 1
          %s709 = smul.addr %s708, 8
          %s710 = scalar_lea.vmem [#allocation2], %s709
          %712 = dma.done %s707, 128
        $region60: #{tpu_custom_call.1} parent=55 // pred_fallthru
          _
        // Predicated region
        $region61: #{tpu_custom_call.1} parent=55 // pred_check
          %p713 = pneg %p206
        $region62: #{tpu_custom_call.1} parent=55 // pred_check_branch
          %715 = sbr.rel (%p713) target = $region64
        $region63: #{tpu_custom_call.1} parent=55 // pred_region
          %s716 = sand.u32 %s191, 1
          %s717 = scalar_lea.sflag [#allocation5], %s716
          %s718 = sand.u32 %s191, 1
          %s719 = scalar_lea.vmem [#allocation4], %s718
          %721 = dma.done %s717, 16
        $region64: #{tpu_custom_call.1} parent=55 // pred_fallthru
          _
      $region56: #{tpu_custom_call.1} parent=5 // pred_fallthru
        _
    $region6: #{tpu_custom_call.1} parent=1 // loop_footer
      %s24 = sadd.s32 1, %s20
    $region7: #{tpu_custom_call.1} parent=1 // loop_footer_branch
      %19 = sbr.rel target = $region3
    $region8: #{tpu_custom_call.1} parent=1 // loop_exit
      _
    %722 = vsyncpa [#allocation3], 1
    %s723 = scalar_lea.sflag [#allocation3], 1
    %724 = vsyncpa %s723, 1
    %725 = vsyncpa [#allocation5], 1
    %s726 = scalar_lea.sflag [#allocation5], 1
    %727 = vsyncpa %s726, 1

</llo_original>
